<compile_context>
chip_gen: v5e
topology: v5e:2x2
jax: 0.10.0
libtpu: 0.0.40
codegen_flags: <defaults>
</compile_context>

<pallas_src>
import jax
import jax.numpy as jnp
from jax.experimental import pallas as pl
from jax.experimental.pallas import tpu as pltpu


def mlp_kernel(xT_ref, w1_ref, b1_ref, w2_ref, b2_ref, w3_ref, b3_ref, o_ref):
    # Batch-on-lanes layout (TB = tile_b lanes):
    #   xT : (4, TB)      w1 : (32, 4)    b1 : (32, 1)
    #   h  : (32, TB)     w2 : (32, 32)   b2 : (32, 1)
    #   y  : (1, TB)      w3 : (1, 32)    b3 : (1, 1)
    h = jnp.dot(w1_ref[...], xT_ref[...], preferred_element_type=jnp.float32)
    h = jnp.maximum(h + b1_ref[...], 0.0)

    h = jnp.dot(w2_ref[...], h, preferred_element_type=jnp.float32)
    h = jnp.maximum(h + b2_ref[...], 0.0)

    y = jnp.dot(w3_ref[...], h, preferred_element_type=jnp.float32)
    o_ref[...] = (y + b3_ref[...]).astype(o_ref.dtype)


def mlp_forward(x, params, *, tile_b=8192):
    """x: (B, 4) float32 -> (B, 1) float32.

    tile_b = batch elements per grid step (lane dimension); must be a
    multiple of 128.  Multiple grid steps give software pipelining and
    megacore sharding of the batch axis.
    """
    w1, b1, w2, b2, w3, b3 = params
    B, f_in = x.shape
    assert f_in == 4, "MLP expects 4 input features"
    assert tile_b % 128 == 0, "tile_b must be a multiple of 128 lanes"

    # Effective tile and padded batch size (lane-aligned).
    if B <= tile_b:
        bp = max(128, pl.cdiv(B, 128) * 128)   # single tile, padded to lanes
        tb = bp
    else:
        bp = pl.cdiv(B, tile_b) * tile_b
        tb = tile_b

    # Layout plumbing in the wrapper: batch onto the lane axis, zero-pad.
    xT = x.T                                   # (4, B)
    if bp != B:
        xT = jnp.pad(xT, ((0, 0), (0, bp - B)))

    grid = (bp // tb,)

    def full(arr):
        # Weights/biases: whole array, constant block index -> stays resident
        # in VMEM across every grid step (no per-tile re-DMA).
        return pl.BlockSpec(arr.shape, lambda i: (0, 0))

    flops = 2 * bp * (4 * 32 + 32 * 32 + 32 * 1)
    param_bytes = sum(int(p.size) * p.dtype.itemsize for p in params)
    bytes_accessed = int(xT.size) * 4 + bp * 4 + param_bytes

    yT = pl.pallas_call(
        mlp_kernel,
        out_shape=jax.ShapeDtypeStruct((1, bp), jnp.float32),
        grid_spec=pltpu.PrefetchScalarGridSpec(
            num_scalar_prefetch=0,
            grid=grid,
            in_specs=[
                pl.BlockSpec((4, tb), lambda i: (0, i)),   # x tile (lanes = batch)
                full(w1), full(b1),
                full(w2), full(b2),
                full(w3), full(b3),
            ],
            out_specs=pl.BlockSpec((1, tb), lambda i: (0, i)),  # lane-dense output
        ),
        compiler_params=pltpu.CompilerParams(
            dimension_semantics=("parallel",)),
        cost_estimate=pl.CostEstimate(
            flops=flops, transcendentals=0, bytes_accessed=bytes_accessed),
    )(xT, w1, b1, w2, b2, w3, b3)

    return yT[0, :B].reshape(B, 1)


def init_params(key):
    """Deterministic init matching PyTorch nn.Linear.

    Weights stored in PyTorch's native (out_features, in_features) layout,
    biases as (out_features, 1) columns (broadcast along lanes in-kernel).
    """
    k1, k2, k3, k4, k5, k6 = jax.random.split(key, 6)

    def linear_init(kw, kb, fan_in, fan_out):
        bound = 1.0 / jnp.sqrt(jnp.float32(fan_in))
        w = jax.random.uniform(kw, (fan_out, fan_in), jnp.float32, -bound, bound)
        b = jax.random.uniform(kb, (fan_out, 1), jnp.float32, -bound, bound)
        return w, b

    w1, b1 = linear_init(k1, k2, 4, 32)
    w2, b2 = linear_init(k3, k4, 32, 32)
    w3, b3 = linear_init(k5, k6, 32, 1)
    return (w1, b1, w2, b2, w3, b3)


def mlp_reference(x, params):
    w1, b1, w2, b2, w3, b3 = params
    h = jnp.maximum(x @ w1.T + b1.T, 0.0)
    h = jnp.maximum(h @ w2.T + b2.T, 0.0)
    return h @ w3.T + b3.T


if __name__ == "__main__":
    key = jax.random.PRNGKey(0)
    kx, kx2, kp = jax.random.split(key, 3)
    params = init_params(kp)

    # Small batch consistent with the module (in_features = 4).
    B = 8
    x = jax.random.normal(kx, (B, 4), dtype=jnp.float32)
    out = jax.block_until_ready(mlp_forward(x, params))
    ref = mlp_reference(x, params)
    assert out.shape == (B, 1)
    assert jnp.allclose(out, ref, atol=1e-5, rtol=1e-5), "mismatch (small batch)"

    # Small multi-tile batch exercising the pipelined multi-step grid path.
    B2 = 384
    x2 = jax.random.normal(kx2, (B2, 4), dtype=jnp.float32)
    out2 = jax.block_until_ready(mlp_forward(x2, params, tile_b=128))
    ref2 = mlp_reference(x2, params)
    assert out2.shape == (B2, 1)
    assert jnp.allclose(out2, ref2, atol=1e-5, rtol=1e-5), "mismatch (tiled batch)"

    print("KERNEL_OK")
</pallas_src>

<mosaic_0001>
module attributes {stable_mosaic.version = 11 : i64} {
  func.func @mlp_kernel(%arg0: i32, %arg1: memref<4x128xf32, #tpu.memory_space<vmem>>, %arg2: memref<32x4xf32, #tpu.memory_space<vmem>>, %arg3: memref<32x1xf32, #tpu.memory_space<vmem>>, %arg4: memref<32x32xf32, #tpu.memory_space<vmem>>, %arg5: memref<32x1xf32, #tpu.memory_space<vmem>>, %arg6: memref<1x32xf32, #tpu.memory_space<vmem>>, %arg7: memref<1x1xf32, #tpu.memory_space<vmem>>, %arg8: memref<1x128xf32, #tpu.memory_space<vmem>>) attributes {dimension_semantics = [#tpu.dimension_semantics<parallel>], iteration_bounds = array<i64: 1>, scalar_prefetch = 0 : i64, scratch_operands = 0 : i64, tpu.core_type = #tpu.core_type<tc>, window_params = [{transform_indices = @transform_0, window_bounds = array<i64: 4, 128>}, {pipeline_mode = #tpu.pipeline_mode<synchronous>, transform_indices = @transform_1, window_bounds = array<i64: 32, 4>}, {pipeline_mode = #tpu.pipeline_mode<synchronous>, transform_indices = @transform_2, window_bounds = array<i64: 32, 1>}, {pipeline_mode = #tpu.pipeline_mode<synchronous>, transform_indices = @transform_3, window_bounds = array<i64: 32, 32>}, {pipeline_mode = #tpu.pipeline_mode<synchronous>, transform_indices = @transform_4, window_bounds = array<i64: 32, 1>}, {pipeline_mode = #tpu.pipeline_mode<synchronous>, transform_indices = @transform_5, window_bounds = array<i64: 1, 32>}, {pipeline_mode = #tpu.pipeline_mode<synchronous>, transform_indices = @transform_6, window_bounds = array<i64: 1, 1>}, {transform_indices = @transform_7, window_bounds = array<i64: 1, 128>}]} {
    %c0 = arith.constant 0 : index
    %c0_0 = arith.constant 0 : index
    %0 = vector.load %arg2[%c0, %c0_0] : memref<32x4xf32, #tpu.memory_space<vmem>>, vector<32x4xf32>
    %c0_1 = arith.constant 0 : index
    %c0_2 = arith.constant 0 : index
    %1 = vector.load %arg1[%c0_1, %c0_2] : memref<4x128xf32, #tpu.memory_space<vmem>>, vector<4x128xf32>
    %cst = arith.constant dense<0.000000e+00> : vector<32x128xf32>
    %2 = tpu.matmul %0, %1, %cst {dimension_numbers = #tpu.dot_dimension_numbers<[1], [0], [0], [1], [0, 0, 1, 1], [], []>} : vector<32x4xf32>, vector<4x128xf32>, vector<32x128xf32> -> vector<32x128xf32>
    %c0_3 = arith.constant 0 : index
    %c0_4 = arith.constant 0 : index
    %3 = vector.load %arg3[%c0_3, %c0_4] : memref<32x1xf32, #tpu.memory_space<vmem>>, vector<32x1xf32>
    %4 = vector.broadcast %3 : vector<32x1xf32> to vector<32x128xf32>
    %5 = arith.addf %2, %4 : vector<32x128xf32>
    %cst_5 = arith.constant 0.000000e+00 : f32
    %6 = vector.broadcast %cst_5 : f32 to vector<32x128xf32>
    %7 = arith.maximumf %5, %6 : vector<32x128xf32>
    %c0_6 = arith.constant 0 : index
    %c0_7 = arith.constant 0 : index
    %8 = vector.load %arg4[%c0_6, %c0_7] : memref<32x32xf32, #tpu.memory_space<vmem>>, vector<32x32xf32>
    %cst_8 = arith.constant dense<0.000000e+00> : vector<32x128xf32>
    %9 = tpu.matmul %8, %7, %cst_8 {dimension_numbers = #tpu.dot_dimension_numbers<[1], [0], [0], [1], [0, 0, 1, 1], [], []>} : vector<32x32xf32>, vector<32x128xf32>, vector<32x128xf32> -> vector<32x128xf32>
    %c0_9 = arith.constant 0 : index
    %c0_10 = arith.constant 0 : index
    %10 = vector.load %arg5[%c0_9, %c0_10] : memref<32x1xf32, #tpu.memory_space<vmem>>, vector<32x1xf32>
    %11 = vector.broadcast %10 : vector<32x1xf32> to vector<32x128xf32>
    %12 = arith.addf %9, %11 : vector<32x128xf32>
    %cst_11 = arith.constant 0.000000e+00 : f32
    %13 = vector.broadcast %cst_11 : f32 to vector<32x128xf32>
    %14 = arith.maximumf %12, %13 : vector<32x128xf32>
    %c0_12 = arith.constant 0 : index
    %c0_13 = arith.constant 0 : index
    %15 = vector.load %arg6[%c0_12, %c0_13] : memref<1x32xf32, #tpu.memory_space<vmem>>, vector<1x32xf32>
    %cst_14 = arith.constant dense<0.000000e+00> : vector<1x128xf32>
    %16 = tpu.matmul %15, %14, %cst_14 {dimension_numbers = #tpu.dot_dimension_numbers<[1], [0], [0], [1], [0, 0, 1, 1], [], []>} : vector<1x32xf32>, vector<32x128xf32>, vector<1x128xf32> -> vector<1x128xf32>
    %c0_15 = arith.constant 0 : index
    %c0_16 = arith.constant 0 : index
    %17 = vector.load %arg7[%c0_15, %c0_16] : memref<1x1xf32, #tpu.memory_space<vmem>>, vector<1x1xf32>
    %18 = vector.broadcast %17 : vector<1x1xf32> to vector<1x128xf32>
    %19 = arith.addf %16, %18 : vector<1x128xf32>
    %c0_17 = arith.constant 0 : index
    %c0_18 = arith.constant 0 : index
    %20 = vector.load %arg8[%c0_17, %c0_18] : memref<1x128xf32, #tpu.memory_space<vmem>>, vector<1x128xf32>
    tpu.vector_store %arg8[%c0_17, %c0_18], %19 {strides = array<i32>} : memref<1x128xf32, #tpu.memory_space<vmem>>, vector<1x128xf32>,
    return
  }
  func.func @transform_0(%arg0: i32) -> (i32, i32) {
    %c0_i32 = arith.constant 0 : i32
    %c0_i32_0 = arith.constant 0 : i32
    return %c0_i32, %arg0 : i32, i32
  }
  func.func @transform_1(%arg0: i32) -> (i32, i32) {
    %c0_i32 = arith.constant 0 : i32
    %c0_i32_0 = arith.constant 0 : i32
    %c0_i32_1 = arith.constant 0 : i32
    return %c0_i32, %c0_i32_0 : i32, i32
  }
  func.func @transform_2(%arg0: i32) -> (i32, i32) {
    %c0_i32 = arith.constant 0 : i32
    %c0_i32_0 = arith.constant 0 : i32
    %c0_i32_1 = arith.constant 0 : i32
    return %c0_i32, %c0_i32_0 : i32, i32
  }
  func.func @transform_3(%arg0: i32) -> (i32, i32) {
    %c0_i32 = arith.constant 0 : i32
    %c0_i32_0 = arith.constant 0 : i32
    %c0_i32_1 = arith.constant 0 : i32
    return %c0_i32, %c0_i32_0 : i32, i32
  }
  func.func @transform_4(%arg0: i32) -> (i32, i32) {
    %c0_i32 = arith.constant 0 : i32
    %c0_i32_0 = arith.constant 0 : i32
    %c0_i32_1 = arith.constant 0 : i32
    return %c0_i32, %c0_i32_0 : i32, i32
  }
  func.func @transform_5(%arg0: i32) -> (i32, i32) {
    %c0_i32 = arith.constant 0 : i32
    %c0_i32_0 = arith.constant 0 : i32
    %c0_i32_1 = arith.constant 0 : i32
    return %c0_i32, %c0_i32_0 : i32, i32
  }
  func.func @transform_6(%arg0: i32) -> (i32, i32) {
    %c0_i32 = arith.constant 0 : i32
    %c0_i32_0 = arith.constant 0 : i32
    %c0_i32_1 = arith.constant 0 : i32
    return %c0_i32, %c0_i32_0 : i32, i32
  }
  func.func @transform_7(%arg0: i32) -> (i32, i32) {
    %c0_i32 = arith.constant 0 : i32
    %c0_i32_0 = arith.constant 0 : i32
    return %c0_i32, %arg0 : i32, i32
  }
}

</mosaic_0001>

<llo_original>
// kernel: tpu_custom_call.1
$region0: #{tpu_custom_call.1}
  #allocation0 [shape = 'u32[]', space=smem, size = 0x4, offset = 0x4, fixed_abs, tag = 'smem constant byte address 0x4 - core index']
  #allocation1 [shape = 'u32[72,128]{1,0:T(1,128)}', space=vmem, size = 0x9000, scoped, tag = 'internal scratch']
  #allocation2 [shape = 'f32[1,1]{1,0:T(1,128)S(1)}', space=vmem, size = 0x200, scoped, tag = 'scoped memory for tpu_custom_call.1']
  %s0 = inlined_call_operand.vmem [shape: f32[4,128], index: 0, kind: input, shape index: {}]
  %s1 = inlined_call_operand.vmem [shape: f32[32,4], index: 1, kind: input, shape index: {}]
  %s2 = inlined_call_operand.vmem [shape: f32[32,1], index: 2, kind: input, shape index: {}]
  %s3 = inlined_call_operand.vmem [shape: f32[32,32], index: 3, kind: input, shape index: {}]
  %s4 = inlined_call_operand.vmem [shape: f32[32,1], index: 4, kind: input, shape index: {}]
  %s5 = inlined_call_operand.vmem [shape: f32[1,32], index: 5, kind: input, shape index: {}]
  %s6 = inlined_call_operand.<no memory space> [shape: f32[1,1], index: 6, kind: input, shape index: {}]
  %s7 = inlined_call_operand.hbm [shape: f32[1,128], index: 7, kind: output, shape index: {}]
  %s8 = sld [smem:[#allocation0]]
  $region38: #{tpu_custom_call.1} parent=0
    _
  %s10 = ssub.s32 1, %s8
  %s11 = scalar_select 0, %s10, %s8
  %v12 = vstv %s6
  %13 = vst [vmem:[#allocation2] sm:$0x1] %v12
  $region1: #{tpu_custom_call.1} parent=0
    #allocation3 [shape = 'u8[512]{0}', space=vmem, size = 0x400, scoped, tag = 'output window, operand 0, single buffered']
    #allocation4 [shape = 's32[1]{0}', space=sflag, size = 0x4, scoped, tag = 'scoped memory for tpu_custom_call.1']
    %14 = vsyncpa [#allocation4], 0
    // Predicated region
    $region2: #{tpu_custom_call.1} parent=1 // pred_check
      _
    $region3: #{tpu_custom_call.1} parent=1 // pred_check_branch
      %16 = sbr.rel (0) target = $region5
    $region4: #{tpu_custom_call.1} parent=1 // pred_region
      _
    $region5: #{tpu_custom_call.1} parent=1 // pred_fallthru
      _
    // Predicated region
    $region6: #{tpu_custom_call.1} parent=1 // pred_check
      _
    $region7: #{tpu_custom_call.1} parent=1 // pred_check_branch
      %18 = sbr.rel (0) target = $region9
    $region8: #{tpu_custom_call.1} parent=1 // pred_region
      _
    $region9: #{tpu_custom_call.1} parent=1 // pred_fallthru
      _
    // Predicated region
    $region10: #{tpu_custom_call.1} parent=1 // pred_check
      _
    $region11: #{tpu_custom_call.1} parent=1 // pred_check_branch
      %20 = sbr.rel (0) target = $region13
    $region12: #{tpu_custom_call.1} parent=1 // pred_region
      _
    $region13: #{tpu_custom_call.1} parent=1 // pred_fallthru
      _
    // Predicated region
    $region14: #{tpu_custom_call.1} parent=1 // pred_check
      _
    $region15: #{tpu_custom_call.1} parent=1 // pred_check_branch
      %22 = sbr.rel (0) target = $region17
    $region16: #{tpu_custom_call.1} parent=1 // pred_region
      _
    $region17: #{tpu_custom_call.1} parent=1 // pred_fallthru
      _
    // Predicated region
    $region18: #{tpu_custom_call.1} parent=1 // pred_check
      _
    $region19: #{tpu_custom_call.1} parent=1 // pred_check_branch
      %24 = sbr.rel (0) target = $region21
    $region20: #{tpu_custom_call.1} parent=1 // pred_region
      _
    $region21: #{tpu_custom_call.1} parent=1 // pred_fallthru
      _
    // Predicated region
    $region22: #{tpu_custom_call.1} parent=1 // pred_check
      _
    $region23: #{tpu_custom_call.1} parent=1 // pred_check_branch
      %26 = sbr.rel (0) target = $region25
    $region24: #{tpu_custom_call.1} parent=1 // pred_region
      _
    $region25: #{tpu_custom_call.1} parent=1 // pred_fallthru
      _
    // Predicated region
    $region26: #{tpu_custom_call.1} parent=1 // pred_check
      _
    $region27: #{tpu_custom_call.1} parent=1 // pred_check_branch
      %28 = sbr.rel (0) target = $region29
    $region28: #{tpu_custom_call.1} parent=1 // pred_region
      _
    $region29: #{tpu_custom_call.1} parent=1 // pred_fallthru
      _
    %v29 = vld [vmem:[%s1] sm:$0xff]
    %v30 = vld [vmem:[%s1 + $0x8] sm:$0xff]
    %v31 = vld [vmem:[%s1 + $0x10] sm:$0xff]
    %v32 = vld [vmem:[%s1 + $0x18] sm:$0xff]
    %v33 = vld [vmem:[%s0] sm:$0xf]
    %v34 = vld [vmem:[%s2] sm:$0xff]
    %v35 = vld [vmem:[%s2 + $0x8] sm:$0xff]
    %v36 = vld [vmem:[%s2 + $0x10] sm:$0xff]
    %v37 = vld [vmem:[%s2 + $0x18] sm:$0xff]
    %39 = vset.pattern.permute.xlu0 0
    %40 = vperm.xlu0 %39, %v34
    %v41 = vpop.permute.xlu0 %40
    %44 = vset.pattern.permute.xlu0 0
    %45 = vperm.xlu0 %44, %v35
    %v46 = vpop.permute.xlu0 %45
    %49 = vset.pattern.permute.xlu0 0
    %50 = vperm.xlu0 %49, %v36
    %v51 = vpop.permute.xlu0 %50
    %54 = vset.pattern.permute.xlu0 0
    %55 = vperm.xlu0 %54, %v37
    %v56 = vpop.permute.xlu0 %55
    %vm58 = vcmask 31744
    %v60 = vsel %vm58, %v29, 0
    %v63 = vsel %vm58, %v30, 0
    %v66 = vsel %vm58, %v31, 0
    %v69 = vsel %vm58, %v32, 0
    %vm71 = vcmask 1043456
    %v73 = vsel %vm71, %v33, 0
    %75 = vmatpush.msra.mxu0 0.0
    %76 = vmatpush.msra.mxu0 0.0
    %77 = vmatpush.msra.mxu0 0.0
    %78 = vmatpush.msra.mxu0 0.0
    %79 = vmatpush.msra.mxu0 0.0
    %80 = vmatpush.msra.mxu0 0.0
    %81 = vmatpush.msra.mxu0 0.0
    %82 = vmatpush.msra.mxu0 0.0
    %83 = vmatpush.msra.mxu0 0.0
    %84 = vmatpush.msra.mxu0 0.0
    %85 = vmatpush.msra.mxu0 0.0
    %86 = vmatpush.msra.mxu0 0.0
    %87 = vmatpush.msra.mxu0 0.0
    %88 = vmatpush.msra.mxu0 0.0
    %89 = vmatpush.msra.mxu0 0.0
    %90 = vmatpush.msra.mxu0 %v73
    %91 = vmatmul.f32.gmra.mxu0 %v60
    %v92 = vpop.f32.mrf.mxu0
    %v93 = vadd.f32 %v41, %v92
    %94 = vmatmul.f32.gmra.mxu0 %v63
    %v95 = vpop.f32.mrf.mxu0
    %v96 = vadd.f32 %v46, %v95
    %97 = vmatmul.f32.gmra.mxu0 %v66
    %v98 = vpop.f32.mrf.mxu0
    %v99 = vadd.f32 %v51, %v98
    %100 = vmatmul.f32.gmra.mxu0 %v69
    %v101 = vpop.f32.mrf.mxu0
    %v102 = vadd.f32 %v56, %v101
    %103 = vdwg.mxu0
    %v104 = vmax.f32 %v93, 0.0
    %v105 = vmax.f32 %v96, 0.0
    %v106 = vmax.f32 %v99, 0.0
    %v107 = vmax.f32 %v102, 0.0
    %v108 = vld [vmem:[%s3] sm:$0xff]
    %v109 = vld [vmem:[%s3 + $0x8] sm:$0xff]
    %v110 = vld [vmem:[%s3 + $0x10] sm:$0xff]
    %v111 = vld [vmem:[%s3 + $0x18] sm:$0xff]
    %v112 = vld [vmem:[%s4] sm:$0xff]
    %v113 = vld [vmem:[%s4 + $0x8] sm:$0xff]
    %v114 = vld [vmem:[%s4 + $0x10] sm:$0xff]
    %v115 = vld [vmem:[%s4 + $0x18] sm:$0xff]
    %117 = vset.pattern.permute.xlu0 0
    %118 = vperm.xlu0 %117, %v112
    %v119 = vpop.permute.xlu0 %118
    %122 = vset.pattern.permute.xlu0 0
    %123 = vperm.xlu0 %122, %v113
    %v124 = vpop.permute.xlu0 %123
    %127 = vset.pattern.permute.xlu0 0
    %128 = vperm.xlu0 %127, %v114
    %v129 = vpop.permute.xlu0 %128
    %132 = vset.pattern.permute.xlu0 0
    %133 = vperm.xlu0 %132, %v115
    %v134 = vpop.permute.xlu0 %133
    %vm136 = vcmask 261120
    %v138 = vsel %vm136, %v108, 0
    %v141 = vsel %vm136, %v109, 0
    %v144 = vsel %vm136, %v110, 0
    %v147 = vsel %vm136, %v111, 0
    %149 = vmatpush.msra.mxu0 0.0
    %150 = vmatpush.msra.mxu0 0.0
    %151 = vmatpush.msra.mxu0 0.0
    %152 = vmatpush.msra.mxu0 0.0
    %153 = vmatpush.msra.mxu0 0.0
    %154 = vmatpush.msra.mxu0 0.0
    %155 = vmatpush.msra.mxu0 0.0
    %156 = vmatpush.msra.mxu0 0.0
    %157 = vmatpush.msra.mxu0 0.0
    %158 = vmatpush.msra.mxu0 0.0
    %159 = vmatpush.msra.mxu0 0.0
    %160 = vmatpush.msra.mxu0 0.0
    %161 = vmatpush.msra.mxu0 %v107
    %162 = vmatpush.msra.mxu0 %v106
    %163 = vmatpush.msra.mxu0 %v105
    %164 = vmatpush.msra.mxu0 %v104
    %165 = vmatmul.f32.gmra.mxu0 %v138
    %v166 = vpop.f32.mrf.mxu0
    %v167 = vadd.f32 %v119, %v166
    %168 = vmatmul.f32.gmra.mxu0 %v141
    %v169 = vpop.f32.mrf.mxu0
    %v170 = vadd.f32 %v124, %v169
    %171 = vmatmul.f32.gmra.mxu0 %v144
    %v172 = vpop.f32.mrf.mxu0
    %v173 = vadd.f32 %v129, %v172
    %174 = vmatmul.f32.gmra.mxu0 %v147
    %v175 = vpop.f32.mrf.mxu0
    %v176 = vadd.f32 %v134, %v175
    %177 = vdwg.mxu0
    %v178 = vmax.f32 %v167, 0.0
    %v179 = vmax.f32 %v170, 0.0
    %v180 = vmax.f32 %v173, 0.0
    %v181 = vmax.f32 %v176, 0.0
    %v182 = vld [vmem:[%s5] sm:$0x1]
    %v183 = vld [vmem:[#allocation2] sm:$0x1]
    %185 = vset.pattern.permute.xlu0 0
    %186 = vperm.xlu0 %185, %v183
    %v187 = vpop.permute.xlu0 %186
    %v189 = vperm.slane %v187, 0
    %v191 = vsel %vm136, %v182, 0
    %193 = vmatpush.msra.mxu0 0.0
    %194 = vmatpush.msra.mxu0 0.0
    %195 = vmatpush.msra.mxu0 0.0
    %196 = vmatpush.msra.mxu0 0.0
    %197 = vmatpush.msra.mxu0 0.0
    %198 = vmatpush.msra.mxu0 0.0
    %199 = vmatpush.msra.mxu0 0.0
    %200 = vmatpush.msra.mxu0 0.0
    %201 = vmatpush.msra.mxu0 0.0
    %202 = vmatpush.msra.mxu0 0.0
    %203 = vmatpush.msra.mxu0 0.0
    %204 = vmatpush.msra.mxu0 0.0
    %205 = vmatpush.msra.mxu0 %v181
    %206 = vmatpush.msra.mxu0 %v180
    %207 = vmatpush.msra.mxu0 %v179
    %208 = vmatpush.msra.mxu0 %v178
    %209 = vmatmul.f32.gmra.mxu0 %v191
    %v210 = vpop.f32.mrf.mxu0
    %v211 = vadd.f32 %v189, %v210
    %212 = vdwg.mxu0
    %213 = vst [vmem:[#allocation3] sm:$0x1] %v211
    // Predicated region
    $region30: #{tpu_custom_call.1} parent=1 // pred_check
      _
    $region31: #{tpu_custom_call.1} parent=1 // pred_check_branch
      %215 = sbr.rel (0) target = $region33
    $region32: #{tpu_custom_call.1} parent=1 // pred_region
      %217 = vsyncadd [#allocation4], 0
      %s219 = sshll.u32 [#allocation3], 4
      %s220 = int_to_ptr.vmem [resolvable:$true] %s219
      %s221 = sshll.u32 %s7, 4
      %s222 = int_to_ptr.hbm [resolvable:$true] %s221
      %224 = dma.vmem_to_hbm [thread:$0]  %s220, 16, %s222, [#allocation4]
    $region33: #{tpu_custom_call.1} parent=1 // pred_fallthru
      _
    // Predicated region
    $region34: #{tpu_custom_call.1} parent=1 // pred_check
      _
    $region35: #{tpu_custom_call.1} parent=1 // pred_check_branch
      %226 = sbr.rel (0) target = $region37
    $region36: #{tpu_custom_call.1} parent=1 // pred_region
      %228 = dma.done [#allocation4], 16
    $region37: #{tpu_custom_call.1} parent=1 // pred_fallthru
      _
    %229 = vsyncpa [#allocation4], 1

</llo_original>
